<compile_context>
chip_gen: v5e
topology: v5e:2x2
jax: 0.10.0
libtpu: 0.0.40
codegen_flags: <defaults>
</compile_context>

<pallas_src>
import jax
import jax.numpy as jnp
from jax.experimental import pallas as pl
from jax.experimental.pallas import tpu as pltpu

LANE = 128


def _round_up(v, m):
    return ((v + m - 1) // m) * m


def _pad2(a, rows, cols):
    return jnp.zeros((rows, cols), a.dtype).at[: a.shape[0], : a.shape[1]].set(a)


def _bf16(v):
    return v.astype(jnp.bfloat16)


# ----------------------------------------------------------------------------
# Pallas kernel: encoder (Linear + ReLU + SAGEConv-mean) + normed-linear head
# One grid step handles a block of `tm` destination node rows.
# ----------------------------------------------------------------------------
def _stellar_kernel(temp_ref,                    # SMEM (1,) f32
                    x_all_ref, x_dst_ref, a_ref,
                    w_in_ref, b_in_ref,
                    w_l_ref, b_l_ref, w_r_ref,
                    wn_ref,
                    out_ref, feat_out_ref):
    w_in = _bf16(w_in_ref[...])
    b_in = b_in_ref[...]

    # feat = relu(x @ W_in + b_in): all source rows (for the aggregation) and
    # the destination row block (for SAGEConv's lin_r term).
    feat_all = jnp.maximum(
        jnp.dot(_bf16(x_all_ref[...]), w_in,
                preferred_element_type=jnp.float32) + b_in, 0.0)
    feat_dst = jnp.maximum(
        jnp.dot(_bf16(x_dst_ref[...]), w_in,
                preferred_element_type=jnp.float32) + b_in, 0.0)

    # SAGEConv (mean aggregation expressed as a dense matmul with the
    # row-normalized adjacency block): h = lin_l(A @ feat) + lin_r(feat)
    agg = jnp.dot(_bf16(a_ref[...]), _bf16(feat_all),
                  preferred_element_type=jnp.float32)
    h = (jnp.dot(_bf16(agg), _bf16(w_l_ref[...]),
                 preferred_element_type=jnp.float32)
         + b_l_ref[...]
         + jnp.dot(_bf16(feat_dst), _bf16(w_r_ref[...]),
                   preferred_element_type=jnp.float32))
    feat_out_ref[...] = h

    # Head: temperature * normalize(h, dim=1) @ normalize(W, dim=0).
    # W's column normalization is hoisted to the wrapper (weight-only).
    # Row norm via rsqrt (EUP): rsqrt(max(ss, eps^2)) == 1/max(||h||, 1e-12),
    # matching F.normalize eps semantics.
    sumsq = jnp.sum(h * h, axis=1, keepdims=True)
    hn = h * jax.lax.rsqrt(jnp.maximum(sumsq, 1e-24))
    out_ref[...] = temp_ref[0] * jnp.dot(
        _bf16(hn), _bf16(wn_ref[...]), preferred_element_type=jnp.float32)


# ----------------------------------------------------------------------------
# Wrapper: padding, dense mean-aggregation matrix, pallas_call
# ----------------------------------------------------------------------------
def vanilla_stellar_forward(x, edge_index, params, *, temperature=10.0, tm=128):
    """x: [N, input_dim] f32; edge_index: [2, E] int32 (row 0 = src, row 1 = dst)."""
    n, d_in = x.shape
    hid = params["w_in"].shape[1]
    num_classes = params["w_cls"].shape[1]

    tm = max(8, min(tm, _round_up(n, 8)))
    tm = _round_up(tm, 8)
    n_dst = _round_up(n, tm)            # destination rows (sublane axis, tiled)
    n_src = _round_up(n_dst, LANE)      # source axis (lane axis of A), lane-dense
    dp = _round_up(d_in, LANE)
    hp = _round_up(hid, LANE)
    cp = _round_up(num_classes, LANE)

    # Dense row-normalized mean-aggregation matrix A[dst, src] = 1/deg(dst)
    # (PyG scatter-mean semantics: isolated nodes aggregate to 0).
    # TODO(synk): at real graph sizes replace this O(N^2) dense A and the agg
    # matmul with a CSR/edge-list segment-mean driven by scalar-prefetched
    # row offsets (PrefetchScalarGridSpec).
    adj = jnp.zeros((n, n), jnp.float32).at[edge_index[1], edge_index[0]].add(1.0)
    deg = jnp.sum(adj, axis=1, keepdims=True)
    a = jnp.where(deg > 0, adj / jnp.maximum(deg, 1.0), 0.0)

    # Hoisted (input-independent) column normalization of the head weight.
    w_cls = params["w_cls"]
    wn = w_cls / jnp.maximum(
        jnp.sqrt(jnp.sum(w_cls * w_cls, axis=0, keepdims=True)), 1e-12)

    # Lane-dense zero padding (zeros are exact no-ops for every dot / norm).
    x_p = _pad2(x, n_src, dp)
    a_p = _pad2(a, n_dst, n_src)
    w_in_p = _pad2(params["w_in"], dp, hp)
    b_in_p = _pad2(params["b_in"], 1, hp)
    w_l_p = _pad2(params["w_l"], hp, hp)
    b_l_p = _pad2(params["b_l"], 1, hp)
    w_r_p = _pad2(params["w_r"], hp, hp)
    wn_p = _pad2(wn, hp, cp)
    temp = jnp.full((1,), temperature, jnp.float32)

    def resident(shape):
        return pl.BlockSpec(shape, lambda i: (0, 0))

    out_p, feat_p = pl.pallas_call(
        _stellar_kernel,
        grid=(n_dst // tm,),
        in_specs=[
            pl.BlockSpec(memory_space=pltpu.MemorySpace.SMEM),   # temperature
            resident((n_src, dp)),                               # x (all sources)
            pl.BlockSpec((tm, dp), lambda i: (i, 0)),            # x (dst block)
            pl.BlockSpec((tm, n_src), lambda i: (i, 0)),         # A row block
            resident((dp, hp)),                                  # w_in
            resident((1, hp)),                                   # b_in
            resident((hp, hp)),                                  # w_l
            resident((1, hp)),                                   # b_l
            resident((hp, hp)),                                  # w_r
            resident((hp, cp)),                                  # wn (pre-normed)
        ],
        out_specs=(
            pl.BlockSpec((tm, cp), lambda i: (i, 0)),            # logits block
            pl.BlockSpec((tm, hp), lambda i: (i, 0)),            # out_feat block
        ),
        out_shape=(
            jax.ShapeDtypeStruct((n_dst, cp), jnp.float32),
            jax.ShapeDtypeStruct((n_dst, hp), jnp.float32),
        ),
        compiler_params=pltpu.CompilerParams(
            dimension_semantics=("parallel",)),
    )(temp, x_p, x_p, a_p, w_in_p, b_in_p, w_l_p, b_l_p, w_r_p, wn_p)

    return out_p[:n, :num_classes], feat_p[:n, :hid]


# ----------------------------------------------------------------------------
# Deterministic synthetic parameter init (shapes from the module's __init__)
# ----------------------------------------------------------------------------
def init_params(key, input_dim, hid_dim, num_classes):
    ks = jax.random.split(key, 6)
    u = lambda k, shape, bound: jax.random.uniform(k, shape, jnp.float32, -bound, bound)
    return {
        "w_in": u(ks[0], (input_dim, hid_dim), 1.0 / jnp.sqrt(input_dim)),
        "b_in": u(ks[1], (1, hid_dim), 1.0 / jnp.sqrt(input_dim)),
        "w_l": u(ks[2], (hid_dim, hid_dim), 1.0 / jnp.sqrt(hid_dim)),
        "b_l": u(ks[3], (1, hid_dim), 1.0 / jnp.sqrt(hid_dim)),
        "w_r": u(ks[4], (hid_dim, hid_dim), 1.0 / jnp.sqrt(hid_dim)),
        # Normed-linear weight; the __init__ column renorm is a semantic no-op
        # because forward re-normalizes columns anyway.
        "w_cls": jax.random.uniform(ks[5], (hid_dim, num_classes), jnp.float32, -1.0, 1.0),
    }


# ----------------------------------------------------------------------------
# References
# ----------------------------------------------------------------------------
def _reference_f32(x, edge_index, params, temperature):
    n = x.shape[0]
    feat = jax.nn.relu(x @ params["w_in"] + params["b_in"])
    adj = jnp.zeros((n, n), jnp.float32).at[edge_index[1], edge_index[0]].add(1.0)
    deg = jnp.sum(adj, axis=1, keepdims=True)
    a = jnp.where(deg > 0, adj / jnp.maximum(deg, 1.0), 0.0)
    h = (a @ feat) @ params["w_l"] + params["b_l"] + feat @ params["w_r"]
    hn = h / jnp.maximum(jnp.linalg.norm(h, axis=1, keepdims=True), 1e-12)
    w = params["w_cls"]
    wn = w / jnp.maximum(jnp.linalg.norm(w, axis=0, keepdims=True), 1e-12)
    return temperature * (hn @ wn), h


def _reference_bf16(x, edge_index, params, temperature):
    """Mirrors the kernel's bf16-operand / f32-accumulate dots exactly."""
    def bdot(p, q):
        return jnp.dot(p.astype(jnp.bfloat16), q.astype(jnp.bfloat16),
                       preferred_element_type=jnp.float32)
    n = x.shape[0]
    adj = jnp.zeros((n, n), jnp.float32).at[edge_index[1], edge_index[0]].add(1.0)
    deg = jnp.sum(adj, axis=1, keepdims=True)
    a = jnp.where(deg > 0, adj / jnp.maximum(deg, 1.0), 0.0)
    feat = jnp.maximum(bdot(x, params["w_in"]) + params["b_in"], 0.0)
    h = bdot(bdot(a, feat), params["w_l"]) + params["b_l"] + bdot(feat, params["w_r"])
    hn = h * jax.lax.rsqrt(jnp.maximum(jnp.sum(h * h, axis=1, keepdims=True), 1e-24))
    w = params["w_cls"]
    wn = w / jnp.maximum(jnp.sqrt(jnp.sum(w * w, axis=0, keepdims=True)), 1e-12)
    return temperature * bdot(hn, wn), h


if __name__ == "__main__":
    N, INPUT_DIM, HID_DIM, NUM_CLASSES = 16, 32, 32, 8
    TEMPERATURE = 10.0

    key = jax.random.PRNGKey(0)
    k_x, k_e, k_p = jax.random.split(key, 3)

    x = jax.random.normal(k_x, (N, INPUT_DIM), jnp.float32)
    # Deterministic small graph: ring edges plus a few random edges.
    ring_src = jnp.arange(N, dtype=jnp.int32)
    ring_dst = (ring_src + 1) % N
    rand_edges = jax.random.randint(k_e, (2, 24), 0, N, dtype=jnp.int32)
    edge_index = jnp.concatenate([jnp.stack([ring_src, ring_dst]), rand_edges], axis=1)

    params = init_params(k_p, INPUT_DIM, HID_DIM, NUM_CLASSES)

    out, out_feat = vanilla_stellar_forward(
        x, edge_index, params, temperature=TEMPERATURE, tm=8)
    jax.block_until_ready((out, out_feat))

    assert out.shape == (N, NUM_CLASSES) and out_feat.shape == (N, HID_DIM)

    # Tight check vs a reference that mirrors the kernel's bf16 MXU operands.
    ref_out16, ref_feat16 = _reference_bf16(x, edge_index, params, TEMPERATURE)
    assert jnp.allclose(out_feat, ref_feat16, atol=5e-3, rtol=5e-3)
    assert jnp.allclose(out, ref_out16, atol=5e-3, rtol=5e-3)

    # Looser sanity check vs the full-f32 math (bf16 operands lose mantissa).
    ref_out32, ref_feat32 = _reference_f32(x, edge_index, params, TEMPERATURE)
    assert jnp.allclose(out_feat, ref_feat32, atol=5e-2, rtol=5e-2)
    assert jnp.allclose(out, ref_out32, atol=2.5e-1, rtol=5e-2)

    print("KERNEL_OK")
</pallas_src>

<mosaic_0001>
module attributes {stable_mosaic.version = 11 : i64} {
  func.func @_stellar_kernel(%arg0: i32, %arg1: memref<1xf32, #tpu.memory_space<smem>>, %arg2: memref<128x128xf32, #tpu.memory_space<vmem>>, %arg3: memref<8x128xf32, #tpu.memory_space<vmem>>, %arg4: memref<8x128xf32, #tpu.memory_space<vmem>>, %arg5: memref<128x128xf32, #tpu.memory_space<vmem>>, %arg6: memref<1x128xf32, #tpu.memory_space<vmem>>, %arg7: memref<128x128xf32, #tpu.memory_space<vmem>>, %arg8: memref<1x128xf32, #tpu.memory_space<vmem>>, %arg9: memref<128x128xf32, #tpu.memory_space<vmem>>, %arg10: memref<128x128xf32, #tpu.memory_space<vmem>>, %arg11: memref<8x128xf32, #tpu.memory_space<vmem>>, %arg12: memref<8x128xf32, #tpu.memory_space<vmem>>) attributes {dimension_semantics = [#tpu.dimension_semantics<parallel>], iteration_bounds = array<i64: 2>, scalar_prefetch = 0 : i64, scratch_operands = 0 : i64, tpu.core_type = #tpu.core_type<tc>, window_params = [{transform_indices = @transform_0, window_bounds = array<i64: 1>}, {pipeline_mode = #tpu.pipeline_mode<synchronous>, transform_indices = @transform_1, window_bounds = array<i64: 128, 128>}, {transform_indices = @transform_2, window_bounds = array<i64: 8, 128>}, {transform_indices = @transform_3, window_bounds = array<i64: 8, 128>}, {pipeline_mode = #tpu.pipeline_mode<synchronous>, transform_indices = @transform_4, window_bounds = array<i64: 128, 128>}, {pipeline_mode = #tpu.pipeline_mode<synchronous>, transform_indices = @transform_5, window_bounds = array<i64: 1, 128>}, {pipeline_mode = #tpu.pipeline_mode<synchronous>, transform_indices = @transform_6, window_bounds = array<i64: 128, 128>}, {pipeline_mode = #tpu.pipeline_mode<synchronous>, transform_indices = @transform_7, window_bounds = array<i64: 1, 128>}, {pipeline_mode = #tpu.pipeline_mode<synchronous>, transform_indices = @transform_8, window_bounds = array<i64: 128, 128>}, {pipeline_mode = #tpu.pipeline_mode<synchronous>, transform_indices = @transform_9, window_bounds = array<i64: 128, 128>}, {transform_indices = @transform_10, window_bounds = array<i64: 8, 128>}, {transform_indices = @transform_11, window_bounds = array<i64: 8, 128>}]} {
    %c0 = arith.constant 0 : index
    %c0_0 = arith.constant 0 : index
    %0 = vector.load %arg5[%c0, %c0_0] : memref<128x128xf32, #tpu.memory_space<vmem>>, vector<128x128xf32>
    %1 = arith.truncf %0 : vector<128x128xf32> to vector<128x128xbf16>
    %c0_1 = arith.constant 0 : index
    %c0_2 = arith.constant 0 : index
    %2 = vector.load %arg6[%c0_1, %c0_2] : memref<1x128xf32, #tpu.memory_space<vmem>>, vector<1x128xf32>
    %c0_3 = arith.constant 0 : index
    %c0_4 = arith.constant 0 : index
    %3 = vector.load %arg2[%c0_3, %c0_4] : memref<128x128xf32, #tpu.memory_space<vmem>>, vector<128x128xf32>
    %4 = arith.truncf %3 : vector<128x128xf32> to vector<128x128xbf16>
    %cst = arith.constant dense<0.000000e+00> : vector<128x128xf32>
    %5 = tpu.matmul %4, %1, %cst {dimension_numbers = #tpu.dot_dimension_numbers<[1], [0], [0], [1], [0, 0, 1, 1], [], []>} : vector<128x128xbf16>, vector<128x128xbf16>, vector<128x128xf32> -> vector<128x128xf32>
    %6 = vector.broadcast %2 : vector<1x128xf32> to vector<128x128xf32>
    %7 = arith.addf %5, %6 : vector<128x128xf32>
    %cst_5 = arith.constant 0.000000e+00 : f32
    %8 = vector.broadcast %cst_5 : f32 to vector<128x128xf32>
    %9 = arith.maximumf %7, %8 : vector<128x128xf32>
    %c0_6 = arith.constant 0 : index
    %c0_7 = arith.constant 0 : index
    %10 = vector.load %arg3[%c0_6, %c0_7] : memref<8x128xf32, #tpu.memory_space<vmem>>, vector<8x128xf32>
    %11 = arith.truncf %10 : vector<8x128xf32> to vector<8x128xbf16>
    %cst_8 = arith.constant dense<0.000000e+00> : vector<8x128xf32>
    %12 = tpu.matmul %11, %1, %cst_8 {dimension_numbers = #tpu.dot_dimension_numbers<[1], [0], [0], [1], [0, 0, 1, 1], [], []>} : vector<8x128xbf16>, vector<128x128xbf16>, vector<8x128xf32> -> vector<8x128xf32>
    %13 = vector.broadcast %2 : vector<1x128xf32> to vector<8x128xf32>
    %14 = arith.addf %12, %13 : vector<8x128xf32>
    %cst_9 = arith.constant 0.000000e+00 : f32
    %15 = vector.broadcast %cst_9 : f32 to vector<8x128xf32>
    %16 = arith.maximumf %14, %15 : vector<8x128xf32>
    %c0_10 = arith.constant 0 : index
    %c0_11 = arith.constant 0 : index
    %17 = vector.load %arg4[%c0_10, %c0_11] : memref<8x128xf32, #tpu.memory_space<vmem>>, vector<8x128xf32>
    %18 = arith.truncf %17 : vector<8x128xf32> to vector<8x128xbf16>
    %19 = arith.truncf %9 : vector<128x128xf32> to vector<128x128xbf16>
    %cst_12 = arith.constant dense<0.000000e+00> : vector<8x128xf32>
    %20 = tpu.matmul %18, %19, %cst_12 {dimension_numbers = #tpu.dot_dimension_numbers<[1], [0], [0], [1], [0, 0, 1, 1], [], []>} : vector<8x128xbf16>, vector<128x128xbf16>, vector<8x128xf32> -> vector<8x128xf32>
    %21 = arith.truncf %20 : vector<8x128xf32> to vector<8x128xbf16>
    %c0_13 = arith.constant 0 : index
    %c0_14 = arith.constant 0 : index
    %22 = vector.load %arg7[%c0_13, %c0_14] : memref<128x128xf32, #tpu.memory_space<vmem>>, vector<128x128xf32>
    %23 = arith.truncf %22 : vector<128x128xf32> to vector<128x128xbf16>
    %cst_15 = arith.constant dense<0.000000e+00> : vector<8x128xf32>
    %24 = tpu.matmul %21, %23, %cst_15 {dimension_numbers = #tpu.dot_dimension_numbers<[1], [0], [0], [1], [0, 0, 1, 1], [], []>} : vector<8x128xbf16>, vector<128x128xbf16>, vector<8x128xf32> -> vector<8x128xf32>
    %c0_16 = arith.constant 0 : index
    %c0_17 = arith.constant 0 : index
    %25 = vector.load %arg8[%c0_16, %c0_17] : memref<1x128xf32, #tpu.memory_space<vmem>>, vector<1x128xf32>
    %26 = vector.broadcast %25 : vector<1x128xf32> to vector<8x128xf32>
    %27 = arith.addf %24, %26 : vector<8x128xf32>
    %28 = arith.truncf %16 : vector<8x128xf32> to vector<8x128xbf16>
    %c0_18 = arith.constant 0 : index
    %c0_19 = arith.constant 0 : index
    %29 = vector.load %arg9[%c0_18, %c0_19] : memref<128x128xf32, #tpu.memory_space<vmem>>, vector<128x128xf32>
    %30 = arith.truncf %29 : vector<128x128xf32> to vector<128x128xbf16>
    %cst_20 = arith.constant dense<0.000000e+00> : vector<8x128xf32>
    %31 = tpu.matmul %28, %30, %cst_20 {dimension_numbers = #tpu.dot_dimension_numbers<[1], [0], [0], [1], [0, 0, 1, 1], [], []>} : vector<8x128xbf16>, vector<128x128xbf16>, vector<8x128xf32> -> vector<8x128xf32>
    %32 = arith.addf %27, %31 : vector<8x128xf32>
    %c0_21 = arith.constant 0 : index
    %c0_22 = arith.constant 0 : index
    %33 = vector.load %arg12[%c0_21, %c0_22] : memref<8x128xf32, #tpu.memory_space<vmem>>, vector<8x128xf32>
    tpu.vector_store %arg12[%c0_21, %c0_22], %32 {strides = array<i32>} : memref<8x128xf32, #tpu.memory_space<vmem>>, vector<8x128xf32>,
    %34 = arith.mulf %32, %32 : vector<8x128xf32>
    %cst_23 = arith.constant dense<0.000000e+00> : vector<8xf32>
    %35 = vector.multi_reduction <add>, %34, %cst_23 [1] : vector<8x128xf32> to vector<8xf32>
    %36 = vector.shape_cast %35 : vector<8xf32> to vector<8x1xf32>
    %cst_24 = arith.constant 1.000000e-24 : f32
    %37 = vector.broadcast %cst_24 : f32 to vector<8x1xf32>
    %38 = arith.maximumf %36, %37 : vector<8x1xf32>
    %39 = math.rsqrt %38 : vector<8x1xf32>
    %40 = vector.broadcast %39 : vector<8x1xf32> to vector<8x128xf32>
    %41 = arith.mulf %32, %40 : vector<8x128xf32>
    %c0_25 = arith.constant 0 : index
    %42 = memref.load %arg1[%c0_25] : memref<1xf32, #tpu.memory_space<smem>>
    %43 = arith.truncf %41 : vector<8x128xf32> to vector<8x128xbf16>
    %c0_26 = arith.constant 0 : index
    %c0_27 = arith.constant 0 : index
    %44 = vector.load %arg10[%c0_26, %c0_27] : memref<128x128xf32, #tpu.memory_space<vmem>>, vector<128x128xf32>
    %45 = arith.truncf %44 : vector<128x128xf32> to vector<128x128xbf16>
    %cst_28 = arith.constant dense<0.000000e+00> : vector<8x128xf32>
    %46 = tpu.matmul %43, %45, %cst_28 {dimension_numbers = #tpu.dot_dimension_numbers<[1], [0], [0], [1], [0, 0, 1, 1], [], []>} : vector<8x128xbf16>, vector<128x128xbf16>, vector<8x128xf32> -> vector<8x128xf32>
    %47 = vector.broadcast %42 : f32 to vector<8x128xf32>
    %48 = arith.mulf %47, %46 : vector<8x128xf32>
    %c0_29 = arith.constant 0 : index
    %c0_30 = arith.constant 0 : index
    %49 = vector.load %arg11[%c0_29, %c0_30] : memref<8x128xf32, #tpu.memory_space<vmem>>, vector<8x128xf32>
    tpu.vector_store %arg11[%c0_29, %c0_30], %48 {strides = array<i32>} : memref<8x128xf32, #tpu.memory_space<vmem>>, vector<8x128xf32>,
    return
  }
  func.func @transform_0(%arg0: i32) -> i32 {
    %c0_i32 = arith.constant 0 : i32
    %c0_i32_0 = arith.constant 0 : i32
    return %c0_i32 : i32
  }
  func.func @transform_1(%arg0: i32) -> (i32, i32) {
    %c0_i32 = arith.constant 0 : i32
    %c0_i32_0 = arith.constant 0 : i32
    %c0_i32_1 = arith.constant 0 : i32
    return %c0_i32, %c0_i32_0 : i32, i32
  }
  func.func @transform_2(%arg0: i32) -> (i32, i32) {
    %c0_i32 = arith.constant 0 : i32
    %c0_i32_0 = arith.constant 0 : i32
    return %arg0, %c0_i32 : i32, i32
  }
  func.func @transform_3(%arg0: i32) -> (i32, i32) {
    %c0_i32 = arith.constant 0 : i32
    %c0_i32_0 = arith.constant 0 : i32
    return %arg0, %c0_i32 : i32, i32
  }
  func.func @transform_4(%arg0: i32) -> (i32, i32) {
    %c0_i32 = arith.constant 0 : i32
    %c0_i32_0 = arith.constant 0 : i32
    %c0_i32_1 = arith.constant 0 : i32
    return %c0_i32, %c0_i32_0 : i32, i32
  }
  func.func @transform_5(%arg0: i32) -> (i32, i32) {
    %c0_i32 = arith.constant 0 : i32
    %c0_i32_0 = arith.constant 0 : i32
    %c0_i32_1 = arith.constant 0 : i32
    return %c0_i32, %c0_i32_0 : i32, i32
  }
  func.func @transform_6(%arg0: i32) -> (i32, i32) {
    %c0_i32 = arith.constant 0 : i32
    %c0_i32_0 = arith.constant 0 : i32
    %c0_i32_1 = arith.constant 0 : i32
    return %c0_i32, %c0_i32_0 : i32, i32
  }
  func.func @transform_7(%arg0: i32) -> (i32, i32) {
    %c0_i32 = arith.constant 0 : i32
    %c0_i32_0 = arith.constant 0 : i32
    %c0_i32_1 = arith.constant 0 : i32
    return %c0_i32, %c0_i32_0 : i32, i32
  }
  func.func @transform_8(%arg0: i32) -> (i32, i32) {
    %c0_i32 = arith.constant 0 : i32
    %c0_i32_0 = arith.constant 0 : i32
    %c0_i32_1 = arith.constant 0 : i32
    return %c0_i32, %c0_i32_0 : i32, i32
  }
  func.func @transform_9(%arg0: i32) -> (i32, i32) {
    %c0_i32 = arith.constant 0 : i32
    %c0_i32_0 = arith.constant 0 : i32
    %c0_i32_1 = arith.constant 0 : i32
    return %c0_i32, %c0_i32_0 : i32, i32
  }
  func.func @transform_10(%arg0: i32) -> (i32, i32) {
    %c0_i32 = arith.constant 0 : i32
    %c0_i32_0 = arith.constant 0 : i32
    return %arg0, %c0_i32 : i32, i32
  }
  func.func @transform_11(%arg0: i32) -> (i32, i32) {
    %c0_i32 = arith.constant 0 : i32
    %c0_i32_0 = arith.constant 0 : i32
    return %arg0, %c0_i32 : i32, i32
  }
}

</mosaic_0001>

<llo_original>
// kernel: tpu_custom_call.1
$region0: #{tpu_custom_call.1}
  #allocation0 [shape = 'u32[]', space=smem, size = 0x4, offset = 0x4, fixed_abs, tag = 'smem constant byte address 0x4 - core index']
  #allocation1 [shape = 'u32[72,128]{1,0:T(1,128)}', space=vmem, size = 0x9000, scoped, tag = 'internal scratch']
  #allocation2 [shape = 'f32[1]{0:T(128)S(6)}', space=smem, size = 0x200, scoped, tag = 'scoped memory for tpu_custom_call.1']
  %s0 = inlined_call_operand.<no memory space> [shape: f32[1], index: 0, kind: input, shape index: {}]
  %s1 = inlined_call_operand.hbm [shape: f32[128,128], index: 1, kind: input, shape index: {}]
  %s2 = inlined_call_operand.hbm [shape: f32[128,128], index: 2, kind: input, shape index: {}]
  %s3 = inlined_call_operand.hbm [shape: f32[16,128], index: 3, kind: input, shape index: {}]
  %s4 = inlined_call_operand.hbm [shape: f32[128,128], index: 4, kind: input, shape index: {}]
  %s5 = inlined_call_operand.vmem [shape: f32[1,128], index: 5, kind: input, shape index: {}]
  %s6 = inlined_call_operand.hbm [shape: f32[128,128], index: 6, kind: input, shape index: {}]
  %s7 = inlined_call_operand.vmem [shape: f32[1,128], index: 7, kind: input, shape index: {}]
  %s8 = inlined_call_operand.hbm [shape: f32[128,128], index: 8, kind: input, shape index: {}]
  %s9 = inlined_call_operand.hbm [shape: f32[128,128], index: 9, kind: input, shape index: {}]
  %s10 = inlined_call_operand.hbm [shape: f32[16,128], index: 10, kind: output, shape index: {0}]
  %s11 = inlined_call_operand.hbm [shape: f32[16,128], index: 11, kind: output, shape index: {1}]
  %12 = xla_tuple %s10, %s11
  %s13 = sld [smem:[#allocation0]]
  $region109: #{tpu_custom_call.1} parent=0
    _
  %s15 = ssub.s32 1, %s13
  %s16 = scalar_select 0, %s15, %s13
  %17 = sst [smem:[#allocation2]] %s0
  $region1: #{tpu_custom_call.1} parent=0
    #allocation3 [shape = 'u8[65536]{0}', space=vmem, size = 0x10000, scoped, tag = 'input window, operand 1, single buffered']
    #allocation4 [shape = 's32[2]{0}', space=sflag, size = 0x8, scoped, tag = 'scoped memory for tpu_custom_call.1']
    #allocation5 [shape = 's32[2]{0}', space=sflag, size = 0x8, scoped, tag = 'scoped memory for tpu_custom_call.1']
    #allocation6 [shape = 'u8[8192]{0}', space=vmem, size = 0x2000, scoped, tag = 'input window, operand 2']
    #allocation7 [shape = 's32[2]{0}', space=sflag, size = 0x8, scoped, tag = 'scoped memory for tpu_custom_call.1']
    #allocation8 [shape = 'u8[8192]{0}', space=vmem, size = 0x2000, scoped, tag = 'input window, operand 3']
    #allocation9 [shape = 'u8[65536]{0}', space=vmem, size = 0x10000, scoped, tag = 'input window, operand 4, single buffered']
    #allocation10 [shape = 's32[1]{0}', space=sflag, size = 0x4, scoped, tag = 'scoped memory for tpu_custom_call.1']
    #allocation11 [shape = 'u8[65536]{0}', space=vmem, size = 0x10000, scoped, tag = 'input window, operand 6, single buffered']
    #allocation12 [shape = 'u8[65536]{0}', space=vmem, size = 0x10000, scoped, tag = 'input window, operand 8, single buffered']
    #allocation13 [shape = 's32[1]{0}', space=sflag, size = 0x4, scoped, tag = 'scoped memory for tpu_custom_call.1']
    #allocation14 [shape = 'u8[65536]{0}', space=vmem, size = 0x10000, scoped, tag = 'input window, operand 9, single buffered']
    #allocation15 [shape = 'u8[8192]{0}', space=vmem, size = 0x2000, scoped, tag = 'output window, operand 0']
    #allocation16 [shape = 'u8[8192]{0}', space=vmem, size = 0x2000, scoped, tag = 'output window, operand 1']
    #allocation17 [shape = 's32[2]{0}', space=sflag, size = 0x8, scoped, tag = 'scoped memory for tpu_custom_call.1']
    %18 = vsyncpa [#allocation4], 0
    %19 = vsyncpa [#allocation7], 0
    %s20 = scalar_lea.sflag [#allocation7], 1
    %21 = vsyncpa %s20, 0
    %22 = vsyncpa [#allocation10], 0
    %23 = vsyncpa [#allocation13], 0
    %24 = vsyncpa [#allocation5], 0
    %s25 = scalar_lea.sflag [#allocation5], 1
    %26 = vsyncpa %s25, 0
    %27 = vsyncpa [#allocation17], 0
    %s28 = scalar_lea.sflag [#allocation17], 1
    %29 = vsyncpa %s28, 0
    loop: start=0, step=1, limit=4
    $region2: #{tpu_custom_call.1} parent=1 // loop_pre_header
      _
    $region3: #{tpu_custom_call.1} parent=1 // loop_header
      %s31 = sphi 0, %s35
      %p32 = scmp.ge.s32.totalorder %s31, 4
      %s39 = sphi 0, %s39
      %s41 = sphi 0, %s39
      %s42 = sphi 0, %s41
      %s56 = sphi 0, %s42
      %s60 = sphi 0, %s60
      %s62 = sphi 0, %s60
      %s63 = sphi 0, %s62
      %s77 = sphi 0, %s63
      %s83 = sphi 0, %s85
      %s86 = sphi 0, %s83
      %s87 = sphi 0, %s86
      %s103 = sphi 0, %s87
      %s109 = sphi 0, %s111
      %s112 = sphi 0, %s109
      %s113 = sphi 0, %s112
      %s129 = sphi 0, %s113
      %s133 = sphi 0, %s133
      %s135 = sphi 0, %s133
      %s136 = sphi 0, %s135
      %s150 = sphi 0, %s136
      %s154 = sphi 0, %s154
      %s156 = sphi 0, %s154
      %s157 = sphi 0, %s156
      %s171 = sphi 0, %s157
      %s175 = sphi 0, %s175
      %s177 = sphi 0, %s175
      %s178 = sphi 0, %s177
      %s192 = sphi 0, %s178
      %s196 = sphi 0, %s196
      %s198 = sphi 0, %s196
      %s199 = sphi 0, %s198
      %s213 = sphi 0, %s199
      %s217 = sphi 0, %s217
      %s219 = sphi 0, %s217
      %s220 = sphi 0, %s219
      %s234 = sphi 0, %s220
      %s238 = sphi 0, %s238
      %s240 = sphi 0, %s238
      %s241 = sphi 0, %s240
      %s255 = sphi 0, %s241
      %s261 = sphi 0, %s263
      %s264 = sphi 0, %s261
      %s265 = sphi 0, %s264
      %s281 = sphi 0, %s265
      %s287 = sphi 0, %s289
      %s290 = sphi 0, %s287
      %s291 = sphi 0, %s290
      %s307 = sphi 0, %s291
    $region4: #{tpu_custom_call.1} parent=1 // loop_header_branch
      %34 = sbr.rel (%p32) target = $region8
    $region5: #{tpu_custom_call.1} parent=1 // loop_body
      %s36 = ssub.s32 %s31, 1
      %s37 = ssub.s32 %s31, 2
      %s38 = sadd.s32 %s31, 1
      %s40 = sadd.s32 %s39, 1
      %p43 = scmp.eq.s32.totalorder %s31, 1
      %p44 = scmp.ne.s32.totalorder %s39, %s41
      %p45 = scmp.eq.s32.totalorder %s31, 0
      %p46 = por %p44, %p45
      %p47 = scmp.ne.s32.totalorder %s39, %s41
      %p48 = scmp.eq.s32.totalorder %s36, 1
      %p49 = por %p47, %p48
      %p50 = scmp.ne.s32.totalorder %s41, %s42
      %p51 = scmp.eq.s32.totalorder %s36, 0
      %p52 = por %p50, %p51
      %p53 = scmp.ne.s32.totalorder %s41, %s42
      %p54 = scmp.eq.s32.totalorder %s37, 1
      %p55 = por %p53, %p54
      %p57 = scmp.ne.s32.totalorder %s42, %s56
      %p58 = scmp.eq.s32.totalorder %s37, 0
      %p59 = por %p57, %p58
      %s61 = sadd.s32 %s60, 1
      %p64 = scmp.eq.s32.totalorder %s31, 1
      %p65 = scmp.ne.s32.totalorder %s60, %s62
      %p66 = scmp.eq.s32.totalorder %s31, 0
      %p67 = por %p65, %p66
      %p68 = scmp.ne.s32.totalorder %s60, %s62
      %p69 = scmp.eq.s32.totalorder %s36, 1
      %p70 = por %p68, %p69
      %p71 = scmp.ne.s32.totalorder %s62, %s63
      %p72 = scmp.eq.s32.totalorder %s36, 0
      %p73 = por %p71, %p72
      %p74 = scmp.ne.s32.totalorder %s62, %s63
      %p75 = scmp.eq.s32.totalorder %s37, 1
      %p76 = por %p74, %p75
      %p78 = scmp.ne.s32.totalorder %s63, %s77
      %p79 = scmp.eq.s32.totalorder %s37, 0
      %p80 = por %p78, %p79
      %s81 = ssub.s32 %s31, %s38
      %p82 = scmp.eq.s32.totalorder %s81, 0
      %s84 = sadd.s32 %s83, 1
      %s85 = scalar_select %p82, %s83, %s84
      %p88 = pneg %p82
      %p89 = scmp.eq.s32.totalorder %s31, 1
      %p90 = por %p88, %p89
      %p91 = scmp.ne.s32.totalorder %s83, %s86
      %p92 = scmp.eq.s32.totalorder %s31, 0
      %p93 = por %p91, %p92
      %p94 = scmp.ne.s32.totalorder %s83, %s86
      %p95 = scmp.eq.s32.totalorder %s36, 1
      %p96 = por %p94, %p95
      %p97 = scmp.ne.s32.totalorder %s86, %s87
      %p98 = scmp.eq.s32.totalorder %s36, 0
      %p99 = por %p97, %p98
      %p100 = scmp.ne.s32.totalorder %s86, %s87
      %p101 = scmp.eq.s32.totalorder %s37, 1
      %p102 = por %p100, %p101
      %p104 = scmp.ne.s32.totalorder %s87, %s103
      %p105 = scmp.eq.s32.totalorder %s37, 0
      %p106 = por %p104, %p105
      %s107 = ssub.s32 %s31, %s38
      %p108 = scmp.eq.s32.totalorder %s107, 0
      %s110 = sadd.s32 %s109, 1
      %s111 = scalar_select %p108, %s109, %s110
      %p114 = pneg %p108
      %p115 = scmp.eq.s32.totalorder %s31, 1
      %p116 = por %p114, %p115
      %p117 = scmp.ne.s32.totalorder %s109, %s112
      %p118 = scmp.eq.s32.totalorder %s31, 0
      %p119 = por %p117, %p118
      %p120 = scmp.ne.s32.totalorder %s109, %s112
      %p121 = scmp.eq.s32.totalorder %s36, 1
      %p122 = por %p120, %p121
      %p123 = scmp.ne.s32.totalorder %s112, %s113
      %p124 = scmp.eq.s32.totalorder %s36, 0
      %p125 = por %p123, %p124
      %p126 = scmp.ne.s32.totalorder %s112, %s113
      %p127 = scmp.eq.s32.totalorder %s37, 1
      %p128 = por %p126, %p127
      %p130 = scmp.ne.s32.totalorder %s113, %s129
      %p131 = scmp.eq.s32.totalorder %s37, 0
      %p132 = por %p130, %p131
      %s134 = sadd.s32 %s133, 1
      %p137 = scmp.eq.s32.totalorder %s31, 1
      %p138 = scmp.ne.s32.totalorder %s133, %s135
      %p139 = scmp.eq.s32.totalorder %s31, 0
      %p140 = por %p138, %p139
      %p141 = scmp.ne.s32.totalorder %s133, %s135
      %p142 = scmp.eq.s32.totalorder %s36, 1
      %p143 = por %p141, %p142
      %p144 = scmp.ne.s32.totalorder %s135, %s136
      %p145 = scmp.eq.s32.totalorder %s36, 0
      %p146 = por %p144, %p145
      %p147 = scmp.ne.s32.totalorder %s135, %s136
      %p148 = scmp.eq.s32.totalorder %s37, 1
      %p149 = por %p147, %p148
      %p151 = scmp.ne.s32.totalorder %s136, %s150
      %p152 = scmp.eq.s32.totalorder %s37, 0
      %p153 = por %p151, %p152
      %s155 = sadd.s32 %s154, 1
      %p158 = scmp.eq.s32.totalorder %s31, 1
      %p159 = scmp.ne.s32.totalorder %s154, %s156
      %p160 = scmp.eq.s32.totalorder %s31, 0
      %p161 = por %p159, %p160
      %p162 = scmp.ne.s32.totalorder %s154, %s156
      %p163 = scmp.eq.s32.totalorder %s36, 1
      %p164 = por %p162, %p163
      %p165 = scmp.ne.s32.totalorder %s156, %s157
      %p166 = scmp.eq.s32.totalorder %s36, 0
      %p167 = por %p165, %p166
      %p168 = scmp.ne.s32.totalorder %s156, %s157
      %p169 = scmp.eq.s32.totalorder %s37, 1
      %p170 = por %p168, %p169
      %p172 = scmp.ne.s32.totalorder %s157, %s171
      %p173 = scmp.eq.s32.totalorder %s37, 0
      %p174 = por %p172, %p173
      %s176 = sadd.s32 %s175, 1
      %p179 = scmp.eq.s32.totalorder %s31, 1
      %p180 = scmp.ne.s32.totalorder %s175, %s177
      %p181 = scmp.eq.s32.totalorder %s31, 0
      %p182 = por %p180, %p181
      %p183 = scmp.ne.s32.totalorder %s175, %s177
      %p184 = scmp.eq.s32.totalorder %s36, 1
      %p185 = por %p183, %p184
      %p186 = scmp.ne.s32.totalorder %s177, %s178
      %p187 = scmp.eq.s32.totalorder %s36, 0
      %p188 = por %p186, %p187
      %p189 = scmp.ne.s32.totalorder %s177, %s178
      %p190 = scmp.eq.s32.totalorder %s37, 1
      %p191 = por %p189, %p190
      %p193 = scmp.ne.s32.totalorder %s178, %s192
      %p194 = scmp.eq.s32.totalorder %s37, 0
      %p195 = por %p193, %p194
      %s197 = sadd.s32 %s196, 1
      %p200 = scmp.eq.s32.totalorder %s31, 1
      %p201 = scmp.ne.s32.totalorder %s196, %s198
      %p202 = scmp.eq.s32.totalorder %s31, 0
      %p203 = por %p201, %p202
      %p204 = scmp.ne.s32.totalorder %s196, %s198
      %p205 = scmp.eq.s32.totalorder %s36, 1
      %p206 = por %p204, %p205
      %p207 = scmp.ne.s32.totalorder %s198, %s199
      %p208 = scmp.eq.s32.totalorder %s36, 0
      %p209 = por %p207, %p208
      %p210 = scmp.ne.s32.totalorder %s198, %s199
      %p211 = scmp.eq.s32.totalorder %s37, 1
      %p212 = por %p210, %p211
      %p214 = scmp.ne.s32.totalorder %s199, %s213
      %p215 = scmp.eq.s32.totalorder %s37, 0
      %p216 = por %p214, %p215
      %s218 = sadd.s32 %s217, 1
      %p221 = scmp.eq.s32.totalorder %s31, 1
      %p222 = scmp.ne.s32.totalorder %s217, %s219
      %p223 = scmp.eq.s32.totalorder %s31, 0
      %p224 = por %p222, %p223
      %p225 = scmp.ne.s32.totalorder %s217, %s219
      %p226 = scmp.eq.s32.totalorder %s36, 1
      %p227 = por %p225, %p226
      %p228 = scmp.ne.s32.totalorder %s219, %s220
      %p229 = scmp.eq.s32.totalorder %s36, 0
      %p230 = por %p228, %p229
      %p231 = scmp.ne.s32.totalorder %s219, %s220
      %p232 = scmp.eq.s32.totalorder %s37, 1
      %p233 = por %p231, %p232
      %p235 = scmp.ne.s32.totalorder %s220, %s234
      %p236 = scmp.eq.s32.totalorder %s37, 0
      %p237 = por %p235, %p236
      %s239 = sadd.s32 %s238, 1
      %p242 = scmp.eq.s32.totalorder %s31, 1
      %p243 = scmp.ne.s32.totalorder %s238, %s240
      %p244 = scmp.eq.s32.totalorder %s31, 0
      %p245 = por %p243, %p244
      %p246 = scmp.ne.s32.totalorder %s238, %s240
      %p247 = scmp.eq.s32.totalorder %s36, 1
      %p248 = por %p246, %p247
      %p249 = scmp.ne.s32.totalorder %s240, %s241
      %p250 = scmp.eq.s32.totalorder %s36, 0
      %p251 = por %p249, %p250
      %p252 = scmp.ne.s32.totalorder %s240, %s241
      %p253 = scmp.eq.s32.totalorder %s37, 1
      %p254 = por %p252, %p253
      %p256 = scmp.ne.s32.totalorder %s241, %s255
      %p257 = scmp.eq.s32.totalorder %s37, 0
      %p258 = por %p256, %p257
      %s259 = ssub.s32 %s31, %s38
      %p260 = scmp.eq.s32.totalorder %s259, 0
      %s262 = sadd.s32 %s261, 1
      %s263 = scalar_select %p260, %s261, %s262
      %p266 = pneg %p260
      %p267 = scmp.eq.s32.totalorder %s31, 1
      %p268 = por %p266, %p267
      %p269 = scmp.ne.s32.totalorder %s261, %s264
      %p270 = scmp.eq.s32.totalorder %s31, 0
      %p271 = por %p269, %p270
      %p272 = scmp.ne.s32.totalorder %s261, %s264
      %p273 = scmp.eq.s32.totalorder %s36, 1
      %p274 = por %p272, %p273
      %p275 = scmp.ne.s32.totalorder %s264, %s265
      %p276 = scmp.eq.s32.totalorder %s36, 0
      %p277 = por %p275, %p276
      %p278 = scmp.ne.s32.totalorder %s264, %s265
      %p279 = scmp.eq.s32.totalorder %s37, 1
      %p280 = por %p278, %p279
      %p282 = scmp.ne.s32.totalorder %s265, %s281
      %p283 = scmp.eq.s32.totalorder %s37, 0
      %p284 = por %p282, %p283
      %s285 = ssub.s32 %s31, %s38
      %p286 = scmp.eq.s32.totalorder %s285, 0
      %s288 = sadd.s32 %s287, 1
      %s289 = scalar_select %p286, %s287, %s288
      %p292 = pneg %p286
      %p293 = scmp.eq.s32.totalorder %s31, 1
      %p294 = por %p292, %p293
      %p295 = scmp.ne.s32.totalorder %s287, %s290
      %p296 = scmp.eq.s32.totalorder %s31, 0
      %p297 = por %p295, %p296
      %p298 = scmp.ne.s32.totalorder %s287, %s290
      %p299 = scmp.eq.s32.totalorder %s36, 1
      %p300 = por %p298, %p299
      %p301 = scmp.ne.s32.totalorder %s290, %s291
      %p302 = scmp.eq.s32.totalorder %s36, 0
      %p303 = por %p301, %p302
      %p304 = scmp.ne.s32.totalorder %s290, %s291
      %p305 = scmp.eq.s32.totalorder %s37, 1
      %p306 = por %p304, %p305
      %p308 = scmp.ne.s32.totalorder %s291, %s307
      %p309 = scmp.eq.s32.totalorder %s37, 0
      %p310 = por %p308, %p309
      %p311 = scmp.le.s32.totalorder 1, %s31
      %p312 = scmp.lt.s32.totalorder %s31, 3
      %p313 = pnand %p311, %p312
      %p314 = pneg %p313
      // Predicated region
      $region9: #{tpu_custom_call.1} parent=5 // pred_check
        _
      $region10: #{tpu_custom_call.1} parent=5 // pred_check_branch
        %316 = sbr.rel (%p313) target = $region12
      $region11: #{tpu_custom_call.1} parent=5 // pred_region
        %s317 = ssub.s32 %s31, 1
        // Predicated region
        $region13: #{tpu_custom_call.1} parent=11 // pred_check
          %p318 = pneg %p52
        $region14: #{tpu_custom_call.1} parent=11 // pred_check_branch
          %320 = sbr.rel (%p318) target = $region16
        $region15: #{tpu_custom_call.1} parent=11 // pred_region
          _
        $region16: #{tpu_custom_call.1} parent=11 // pred_fallthru
          _
        // Predicated region
        $region17: #{tpu_custom_call.1} parent=11 // pred_check
          %p321 = pneg %p73
        $region18: #{tpu_custom_call.1} parent=11 // pred_check_branch
          %323 = sbr.rel (%p321) target = $region20
        $region19: #{tpu_custom_call.1} parent=11 // pred_region
          %325 = vsyncadd [#allocation4], 0
          %s326 = sshll.u32 %s1, 4
          %s327 = int_to_ptr.hbm [resolvable:$true] %s326
          %s328 = sshll.u32 [#allocation3], 4
          %s329 = int_to_ptr.vmem [resolvable:$true] %s328
          %334 = dma.hbm_to_vmem [thread:$0]  %s327, 2048, %s329, [#allocation4], 128, 128, 8
        $region20: #{tpu_custom_call.1} parent=11 // pred_fallthru
          _
        // Predicated region
        $region21: #{tpu_custom_call.1} parent=11 // pred_check
          %p335 = pneg %p146
        $region22: #{tpu_custom_call.1} parent=11 // pred_check_branch
          %337 = sbr.rel (%p335) target = $region24
        $region23: #{tpu_custom_call.1} parent=11 // pred_region
          %339 = vsyncadd [#allocation10], 0
          %s340 = sshll.u32 %s4, 4
          %s341 = int_to_ptr.hbm [resolvable:$true] %s340
          %s342 = sshll.u32 [#allocation9], 4
          %s343 = int_to_ptr.vmem [resolvable:$true] %s342
          %348 = dma.hbm_to_vmem [thread:$0]  %s341, 2048, %s343, [#allocation10], 128, 128, 8
        $region24: #{tpu_custom_call.1} parent=11 // pred_fallthru
          _
        // Predicated region
        $region25: #{tpu_custom_call.1} parent=11 // pred_check
          %p349 = pneg %p167
        $region26: #{tpu_custom_call.1} parent=11 // pred_check_branch
          %351 = sbr.rel (%p349) target = $region28
        $region27: #{tpu_custom_call.1} parent=11 // pred_region
          _
        $region28: #{tpu_custom_call.1} parent=11 // pred_fallthru
          _
        // Predicated region
        $region29: #{tpu_custom_call.1} parent=11 // pred_check
          %p352 = pneg %p188
        $region30: #{tpu_custom_call.1} parent=11 // pred_check_branch
          %354 = sbr.rel (%p352) target = $region32
        $region31: #{tpu_custom_call.1} parent=11 // pred_region
          %356 = vsyncadd [#allocation10], 0
          %s357 = sshll.u32 %s6, 4
          %s358 = int_to_ptr.hbm [resolvable:$true] %s357
          %s359 = sshll.u32 [#allocation11], 4
          %s360 = int_to_ptr.vmem [resolvable:$true] %s359
          %365 = dma.hbm_to_vmem [thread:$0]  %s358, 2048, %s360, [#allocation10], 128, 128, 8
        $region32: #{tpu_custom_call.1} parent=11 // pred_fallthru
          _
        // Predicated region
        $region33: #{tpu_custom_call.1} parent=11 // pred_check
          %p366 = pneg %p209
        $region34: #{tpu_custom_call.1} parent=11 // pred_check_branch
          %368 = sbr.rel (%p366) target = $region36
        $region35: #{tpu_custom_call.1} parent=11 // pred_region
          _
        $region36: #{tpu_custom_call.1} parent=11 // pred_fallthru
          _
        // Predicated region
        $region37: #{tpu_custom_call.1} parent=11 // pred_check
          %p369 = pneg %p230
        $region38: #{tpu_custom_call.1} parent=11 // pred_check_branch
          %371 = sbr.rel (%p369) target = $region40
        $region39: #{tpu_custom_call.1} parent=11 // pred_region
          %373 = vsyncadd [#allocation13], 0
          %s374 = sshll.u32 %s8, 4
          %s375 = int_to_ptr.hbm [resolvable:$true] %s374
          %s376 = sshll.u32 [#allocation12], 4
          %s377 = int_to_ptr.vmem [resolvable:$true] %s376
          %382 = dma.hbm_to_vmem [thread:$0]  %s375, 2048, %s377, [#allocation13], 128, 128, 8
        $region40: #{tpu_custom_call.1} parent=11 // pred_fallthru
          _
        // Predicated region
        $region41: #{tpu_custom_call.1} parent=11 // pred_check
          %p383 = pneg %p251
        $region42: #{tpu_custom_call.1} parent=11 // pred_check_branch
          %385 = sbr.rel (%p383) target = $region44
        $region43: #{tpu_custom_call.1} parent=11 // pred_region
          %387 = vsyncadd [#allocation13], 0
          %s388 = sshll.u32 %s9, 4
          %s389 = int_to_ptr.hbm [resolvable:$true] %s388
          %s390 = sshll.u32 [#allocation14], 4
          %s391 = int_to_ptr.vmem [resolvable:$true] %s390
          %396 = dma.hbm_to_vmem [thread:$0]  %s389, 2048, %s391, [#allocation13], 128, 128, 8
        $region44: #{tpu_custom_call.1} parent=11 // pred_fallthru
          _
      $region12: #{tpu_custom_call.1} parent=5 // pred_fallthru
        _
      %p397 = scmp.lt.s32.totalorder %s31, 2
      // Predicated region
      $region45: #{tpu_custom_call.1} parent=5 // pred_check
        %p398 = pneg %p397
      $region46: #{tpu_custom_call.1} parent=5 // pred_check_branch
        %400 = sbr.rel (%p398) target = $region48
      $region47: #{tpu_custom_call.1} parent=5 // pred_region
        // Predicated region
        $region49: #{tpu_custom_call.1} parent=47 // pred_check
          %p401 = pneg %p93
        $region50: #{tpu_custom_call.1} parent=47 // pred_check_branch
          %403 = sbr.rel (%p401) target = $region52
        $region51: #{tpu_custom_call.1} parent=47 // pred_region
          %s404 = sand.u32 %s31, 1
          %s405 = scalar_lea.sflag [#allocation7], %s404
          %s406 = sand.u32 %s83, 1
          %s407 = smul.addr %s406, 8
          %s408 = scalar_lea.vmem [#allocation6], %s407
          %410 = vsyncadd %s405, 0
          %s411 = smul.addr %s31, 8
          %s412 = scalar_lea.hbm %s2, %s411
          %s414 = sshll.u32 %s412, 4
          %s415 = int_to_ptr.hbm [resolvable:$true] %s414
          %s416 = sshll.u32 %s408, 4
          %s417 = int_to_ptr.vmem [resolvable:$true] %s416
          %419 = dma.hbm_to_vmem [thread:$0]  %s415, 128, %s417, %s405
        $region52: #{tpu_custom_call.1} parent=47 // pred_fallthru
          _
        // Predicated region
        $region53: #{tpu_custom_call.1} parent=47 // pred_check
          %p420 = pneg %p119
        $region54: #{tpu_custom_call.1} parent=47 // pred_check_branch
          %422 = sbr.rel (%p420) target = $region56
        $region55: #{tpu_custom_call.1} parent=47 // pred_region
          %s423 = sand.u32 %s31, 1
          %s424 = scalar_lea.sflag [#allocation7], %s423
          %s425 = sand.u32 %s109, 1
          %s426 = smul.addr %s425, 8
          %s427 = scalar_lea.vmem [#allocation8], %s426
          %429 = vsyncadd %s424, 0
          %s430 = smul.addr %s31, 8
          %s431 = scalar_lea.hbm %s3, %s430
          %s433 = sshll.u32 %s431, 4
          %s434 = int_to_ptr.hbm [resolvable:$true] %s433
          %s435 = sshll.u32 %s427, 4
          %s436 = int_to_ptr.vmem [resolvable:$true] %s435
          %438 = dma.hbm_to_vmem [thread:$0]  %s434, 128, %s436, %s424
        $region56: #{tpu_custom_call.1} parent=47 // pred_fallthru
          _
      $region48: #{tpu_custom_call.1} parent=5 // pred_fallthru
        _
      %p439 = scmp.le.s32.totalorder 1, %s31
      %p440 = scmp.lt.s32.totalorder %s31, 3
      %p441 = pnand %p439, %p440
      %p442 = pneg %p441
      // Predicated region
      $region57: #{tpu_custom_call.1} parent=5 // pred_check
        _
      $region58: #{tpu_custom_call.1} parent=5 // pred_check_branch
        %444 = sbr.rel (%p441) target = $region60
      $region59: #{tpu_custom_call.1} parent=5 // pred_region
        %s445 = ssub.s32 %s31, 1
        // Predicated region
        $region61: #{tpu_custom_call.1} parent=59 // pred_check
          %p446 = pneg %p73
        $region62: #{tpu_custom_call.1} parent=59 // pred_check_branch
          %448 = sbr.rel (%p446) target = $region64
        $region63: #{tpu_custom_call.1} parent=59 // pred_region
          %450 = dma.done [#allocation4], 2048
        $region64: #{tpu_custom_call.1} parent=59 // pred_fallthru
          _
        %s451 = sand.u32 %s36, 1
        %s452 = scalar_lea.sflag [#allocation7], %s451
        %s453 = sand.u32 %s86, 1
        %s454 = smul.addr %s453, 8
        %s455 = scalar_lea.vmem [#allocation6], %s454
        // Predicated region
        $region65: #{tpu_custom_call.1} parent=59 // pred_check
          %p456 = pneg %p99
        $region66: #{tpu_custom_call.1} parent=59 // pred_check_branch
          %458 = sbr.rel (%p456) target = $region68
        $region67: #{tpu_custom_call.1} parent=59 // pred_region
          %460 = dma.done %s452, 128
        $region68: #{tpu_custom_call.1} parent=59 // pred_fallthru
          _
        %s461 = sand.u32 %s36, 1
        %s462 = scalar_lea.sflag [#allocation7], %s461
        %s463 = sand.u32 %s112, 1
        %s464 = smul.addr %s463, 8
        %s465 = scalar_lea.vmem [#allocation8], %s464
        // Predicated region
        $region69: #{tpu_custom_call.1} parent=59 // pred_check
          %p466 = pneg %p125
        $region70: #{tpu_custom_call.1} parent=59 // pred_check_branch
          %468 = sbr.rel (%p466) target = $region72
        $region71: #{tpu_custom_call.1} parent=59 // pred_region
          %470 = dma.done %s462, 128
        $region72: #{tpu_custom_call.1} parent=59 // pred_fallthru
          _
        // Predicated region
        $region73: #{tpu_custom_call.1} parent=59 // pred_check
          %p471 = pneg %p146
        $region74: #{tpu_custom_call.1} parent=59 // pred_check_branch
          %473 = sbr.rel (%p471) target = $region76
        $region75: #{tpu_custom_call.1} parent=59 // pred_region
          %475 = dma.done [#allocation10], 2048
        $region76: #{tpu_custom_call.1} parent=59 // pred_fallthru
          _
        // Predicated region
        $region77: #{tpu_custom_call.1} parent=59 // pred_check
          %p476 = pneg %p188
        $region78: #{tpu_custom_call.1} parent=59 // pred_check_branch
          %478 = sbr.rel (%p476) target = $region80
        $region79: #{tpu_custom_call.1} parent=59 // pred_region
          %480 = dma.done [#allocation10], 2048
        $region80: #{tpu_custom_call.1} parent=59 // pred_fallthru
          _
        // Predicated region
        $region81: #{tpu_custom_call.1} parent=59 // pred_check
          %p481 = pneg %p230
        $region82: #{tpu_custom_call.1} parent=59 // pred_check_branch
          %483 = sbr.rel (%p481) target = $region84
        $region83: #{tpu_custom_call.1} parent=59 // pred_region
          %485 = dma.done [#allocation13], 2048
        $region84: #{tpu_custom_call.1} parent=59 // pred_fallthru
          _
        // Predicated region
        $region85: #{tpu_custom_call.1} parent=59 // pred_check
          %p486 = pneg %p251
        $region86: #{tpu_custom_call.1} parent=59 // pred_check_branch
          %488 = sbr.rel (%p486) target = $region88
        $region87: #{tpu_custom_call.1} parent=59 // pred_region
          %490 = dma.done [#allocation13], 2048
        $region88: #{tpu_custom_call.1} parent=59 // pred_fallthru
          _
        %p491 = pneg %p52
        %p492 = pneg %p49
        %p493 = pneg %p73
        %p494 = pneg %p70
        %s495 = sand.u32 %s36, 1
        %s496 = scalar_lea.sflag [#allocation7], %s495
        %s497 = sand.u32 %s86, 1
        %s498 = smul.addr %s497, 8
        %s499 = scalar_lea.vmem [#allocation6], %s498
        %p500 = pneg %p99
        %p501 = pneg %p96
        %s502 = sand.u32 %s36, 1
        %s503 = scalar_lea.sflag [#allocation7], %s502
        %s504 = sand.u32 %s112, 1
        %s505 = smul.addr %s504, 8
        %s506 = scalar_lea.vmem [#allocation8], %s505
        %p507 = pneg %p125
        %p508 = pneg %p122
        %p509 = pneg %p146
        %p510 = pneg %p143
        %p511 = pneg %p167
        %p512 = pneg %p164
        %p513 = pneg %p188
        %p514 = pneg %p185
        %p515 = pneg %p209
        %p516 = pneg %p206
        %p517 = pneg %p230
        %p518 = pneg %p227
        %p519 = pneg %p251
        %p520 = pneg %p248
        %p521 = pneg %p277
        %p522 = pneg %p274
        %s523 = sand.u32 %s264, 1
        %s524 = scalar_lea.sflag [#allocation5], %s523
        %s525 = sand.u32 %s264, 1
        %s526 = smul.addr %s525, 8
        %s527 = scalar_lea.vmem [#allocation15], %s526
        %p528 = pneg %p303
        %p529 = pneg %p300
        %s530 = sand.u32 %s290, 1
        %s531 = scalar_lea.sflag [#allocation17], %s530
        %s532 = sand.u32 %s290, 1
        %s533 = smul.addr %s532, 8
        %s534 = scalar_lea.vmem [#allocation16], %s533
        %v535 = vld [vmem:[#allocation9] sm:$0xff]
        %v536 = vld [vmem:[#allocation9 + $0x8] sm:$0xff]
        %v537 = vld [vmem:[#allocation9 + $0x10] sm:$0xff]
        %v538 = vld [vmem:[#allocation9 + $0x18] sm:$0xff]
        %v539 = vld [vmem:[#allocation9 + $0x20] sm:$0xff]
        %v540 = vld [vmem:[#allocation9 + $0x28] sm:$0xff]
        %v541 = vld [vmem:[#allocation9 + $0x30] sm:$0xff]
        %v542 = vld [vmem:[#allocation9 + $0x38] sm:$0xff]
        %v543 = vld [vmem:[#allocation9 + $0x40] sm:$0xff]
        %v544 = vld [vmem:[#allocation9 + $0x48] sm:$0xff]
        %v545 = vld [vmem:[#allocation9 + $0x50] sm:$0xff]
        %v546 = vld [vmem:[#allocation9 + $0x58] sm:$0xff]
        %v547 = vld [vmem:[#allocation9 + $0x60] sm:$0xff]
        %v548 = vld [vmem:[#allocation9 + $0x68] sm:$0xff]
        %v549 = vld [vmem:[#allocation9 + $0x70] sm:$0xff]
        %v550 = vld [vmem:[#allocation9 + $0x78] sm:$0xff]
        %v551 = vpack.c.bf16 %v536, %v535
        %v552 = vpack.c.bf16 %v538, %v537
        %v553 = vpack.c.bf16 %v540, %v539
        %v554 = vpack.c.bf16 %v542, %v541
        %v555 = vpack.c.bf16 %v544, %v543
        %v556 = vpack.c.bf16 %v546, %v545
        %v557 = vpack.c.bf16 %v548, %v547
        %v558 = vpack.c.bf16 %v550, %v549
        %v559 = vld [vmem:[%s5] sm:$0x1]
        %v560 = vld [vmem:[#allocation3] sm:$0xff]
        %v561 = vld [vmem:[#allocation3 + $0x8] sm:$0xff]
        %v562 = vld [vmem:[#allocation3 + $0x10] sm:$0xff]
        %v563 = vld [vmem:[#allocation3 + $0x18] sm:$0xff]
        %v564 = vld [vmem:[#allocation3 + $0x20] sm:$0xff]
        %v565 = vld [vmem:[#allocation3 + $0x28] sm:$0xff]
        %v566 = vld [vmem:[#allocation3 + $0x30] sm:$0xff]
        %v567 = vld [vmem:[#allocation3 + $0x38] sm:$0xff]
        %v568 = vld [vmem:[#allocation3 + $0x40] sm:$0xff]
        %v569 = vld [vmem:[#allocation3 + $0x48] sm:$0xff]
        %v570 = vld [vmem:[#allocation3 + $0x50] sm:$0xff]
        %v571 = vld [vmem:[#allocation3 + $0x58] sm:$0xff]
        %v572 = vld [vmem:[#allocation3 + $0x60] sm:$0xff]
        %v573 = vld [vmem:[#allocation3 + $0x68] sm:$0xff]
        %v574 = vld [vmem:[#allocation3 + $0x70] sm:$0xff]
        %v575 = vld [vmem:[#allocation3 + $0x78] sm:$0xff]
        %v576 = vpack.c.bf16 %v561, %v560
        %v577 = vpack.c.bf16 %v563, %v562
        %v578 = vpack.c.bf16 %v565, %v564
        %v579 = vpack.c.bf16 %v567, %v566
        %v580 = vpack.c.bf16 %v569, %v568
        %v581 = vpack.c.bf16 %v571, %v570
        %v582 = vpack.c.bf16 %v573, %v572
        %v583 = vpack.c.bf16 %v575, %v574
        %v585 = vperm.slane %v559, 0
        %587 = vmatpush.bf16.msra.mxu0 %v558
        %588 = vmatpush.bf16.msra.mxu0 %v557
        %589 = vmatpush.bf16.msra.mxu0 %v556
        %590 = vmatpush.bf16.msra.mxu0 %v555
        %591 = vmatpush.bf16.msra.mxu0 %v554
        %592 = vmatpush.bf16.msra.mxu0 %v553
        %593 = vmatpush.bf16.msra.mxu0 %v552
        %594 = vmatpush.bf16.msra.mxu0 %v551
        %595 = vmatmul.bf16.gmra.mxu0 %v576
        %v596 = vpop.f32.mrf.mxu0
        %v597 = vadd.f32 %v585, %v596
        %v598 = vpop.f32.mrf.mxu0
        %v599 = vadd.f32 %v585, %v598
        %600 = vmatmul.bf16.gmra.mxu0 %v577
        %v601 = vpop.f32.mrf.mxu0
        %v602 = vadd.f32 %v585, %v601
        %v603 = vpop.f32.mrf.mxu0
        %v604 = vadd.f32 %v585, %v603
        %605 = vmatmul.bf16.gmra.mxu0 %v578
        %v606 = vpop.f32.mrf.mxu0
        %v607 = vadd.f32 %v585, %v606
        %v608 = vpop.f32.mrf.mxu0
        %v609 = vadd.f32 %v585, %v608
        %610 = vmatmul.bf16.gmra.mxu0 %v579
        %v611 = vpop.f32.mrf.mxu0
        %v612 = vadd.f32 %v585, %v611
        %v613 = vpop.f32.mrf.mxu0
        %v614 = vadd.f32 %v585, %v613
        %615 = vmatmul.bf16.gmra.mxu0 %v580
        %v616 = vpop.f32.mrf.mxu0
        %v617 = vadd.f32 %v585, %v616
        %v618 = vpop.f32.mrf.mxu0
        %v619 = vadd.f32 %v585, %v618
        %620 = vmatmul.bf16.gmra.mxu0 %v581
        %v621 = vpop.f32.mrf.mxu0
        %v622 = vadd.f32 %v585, %v621
        %v623 = vpop.f32.mrf.mxu0
        %v624 = vadd.f32 %v585, %v623
        %625 = vmatmul.bf16.gmra.mxu0 %v582
        %v626 = vpop.f32.mrf.mxu0
        %v627 = vadd.f32 %v585, %v626
        %v628 = vpop.f32.mrf.mxu0
        %v629 = vadd.f32 %v585, %v628
        %630 = vmatmul.bf16.gmra.mxu0 %v583
        %v631 = vpop.f32.mrf.mxu0
        %v632 = vadd.f32 %v585, %v631
        %v633 = vpop.f32.mrf.mxu0
        %v634 = vadd.f32 %v585, %v633
        %635 = vdwg.mxu0
        %v636 = vmax.f32 %v597, 0.0
        %v637 = vmax.f32 %v599, 0.0
        %v638 = vmax.f32 %v602, 0.0
        %v639 = vmax.f32 %v604, 0.0
        %v640 = vmax.f32 %v607, 0.0
        %v641 = vmax.f32 %v609, 0.0
        %v642 = vmax.f32 %v612, 0.0
        %v643 = vmax.f32 %v614, 0.0
        %v644 = vmax.f32 %v617, 0.0
        %v645 = vmax.f32 %v619, 0.0
        %v646 = vmax.f32 %v622, 0.0
        %v647 = vmax.f32 %v624, 0.0
        %v648 = vmax.f32 %v627, 0.0
        %v649 = vmax.f32 %v629, 0.0
        %v650 = vmax.f32 %v632, 0.0
        %v651 = vmax.f32 %v634, 0.0
        %v652 = vld [vmem:[%s455] sm:$0xff]
        %v653 = vpack.c.bf16 %v652, %v652
        %654 = vmatpush.bf16.msra.mxu0 %v558
        %655 = vmatpush.bf16.msra.mxu0 %v557
        %656 = vmatpush.bf16.msra.mxu0 %v556
        %657 = vmatpush.bf16.msra.mxu0 %v555
        %658 = vmatpush.bf16.msra.mxu0 %v554
        %659 = vmatpush.bf16.msra.mxu0 %v553
        %660 = vmatpush.bf16.msra.mxu0 %v552
        %661 = vmatpush.bf16.msra.mxu0 %v551
        %662 = vmatmul.bf16.gmra.mxu0 %v653
        %v663 = vpop.f32.mrf.mxu0
        %v664 = vadd.f32 %v585, %v663
        %v665 = vpop.f32.mrf.mxu0
        %666 = vdwg.mxu0
        %v667 = vmax.f32 %v664, 0.0
        %v668 = vld [vmem:[%s465] sm:$0xff]
        %v669 = vpack.c.bf16 %v668, %v668
        %v670 = vpack.c.bf16 %v637, %v636
        %v671 = vpack.c.bf16 %v639, %v638
        %v672 = vpack.c.bf16 %v641, %v640
        %v673 = vpack.c.bf16 %v643, %v642
        %v674 = vpack.c.bf16 %v645, %v644
        %v675 = vpack.c.bf16 %v647, %v646
        %v676 = vpack.c.bf16 %v649, %v648
        %v677 = vpack.c.bf16 %v651, %v650
        %678 = vmatpush.bf16.msra.mxu0 %v677
        %679 = vmatpush.bf16.msra.mxu0 %v676
        %680 = vmatpush.bf16.msra.mxu0 %v675
        %681 = vmatpush.bf16.msra.mxu0 %v674
        %682 = vmatpush.bf16.msra.mxu0 %v673
        %683 = vmatpush.bf16.msra.mxu0 %v672
        %684 = vmatpush.bf16.msra.mxu0 %v671
        %685 = vmatpush.bf16.msra.mxu0 %v670
        %686 = vmatmul.bf16.gmra.mxu0 %v669
        %v687 = vpop.f32.mrf.mxu0
        %v688 = vadd.f32 0.0, %v687
        %v689 = vpop.f32.mrf.mxu0
        %690 = vdwg.mxu0
        %v691 = vpack.c.bf16 %v688, %v688
        %v692 = vld [vmem:[#allocation11] sm:$0xff]
        %v693 = vld [vmem:[#allocation11 + $0x8] sm:$0xff]
        %v694 = vld [vmem:[#allocation11 + $0x10] sm:$0xff]
        %v695 = vld [vmem:[#allocation11 + $0x18] sm:$0xff]
        %v696 = vld [vmem:[#allocation11 + $0x20] sm:$0xff]
        %v697 = vld [vmem:[#allocation11 + $0x28] sm:$0xff]
        %v698 = vld [vmem:[#allocation11 + $0x30] sm:$0xff]
        %v699 = vld [vmem:[#allocation11 + $0x38] sm:$0xff]
        %v700 = vld [vmem:[#allocation11 + $0x40] sm:$0xff]
        %v701 = vld [vmem:[#allocation11 + $0x48] sm:$0xff]
        %v702 = vld [vmem:[#allocation11 + $0x50] sm:$0xff]
        %v703 = vld [vmem:[#allocation11 + $0x58] sm:$0xff]
        %v704 = vld [vmem:[#allocation11 + $0x60] sm:$0xff]
        %v705 = vld [vmem:[#allocation11 + $0x68] sm:$0xff]
        %v706 = vld [vmem:[#allocation11 + $0x70] sm:$0xff]
        %v707 = vld [vmem:[#allocation11 + $0x78] sm:$0xff]
        %v708 = vpack.c.bf16 %v693, %v692
        %v709 = vpack.c.bf16 %v695, %v694
        %v710 = vpack.c.bf16 %v697, %v696
        %v711 = vpack.c.bf16 %v699, %v698
        %v712 = vpack.c.bf16 %v701, %v700
        %v713 = vpack.c.bf16 %v703, %v702
        %v714 = vpack.c.bf16 %v705, %v704
        %v715 = vpack.c.bf16 %v707, %v706
        %v716 = vld [vmem:[%s7] sm:$0x1]
        %v718 = vperm.slane %v716, 0
        %720 = vmatpush.bf16.msra.mxu0 %v715
        %721 = vmatpush.bf16.msra.mxu0 %v714
        %722 = vmatpush.bf16.msra.mxu0 %v713
        %723 = vmatpush.bf16.msra.mxu0 %v712
        %724 = vmatpush.bf16.msra.mxu0 %v711
        %725 = vmatpush.bf16.msra.mxu0 %v710
        %726 = vmatpush.bf16.msra.mxu0 %v709
        %727 = vmatpush.bf16.msra.mxu0 %v708
        %728 = vmatmul.bf16.gmra.mxu0 %v691
        %v729 = vpop.f32.mrf.mxu0
        %v730 = vadd.f32 %v718, %v729
        %v731 = vpop.f32.mrf.mxu0
        %732 = vdwg.mxu0
        %v733 = vpack.c.bf16 %v667, %v667
        %v734 = vld [vmem:[#allocation12] sm:$0xff]
        %v735 = vld [vmem:[#allocation12 + $0x8] sm:$0xff]
        %v736 = vld [vmem:[#allocation12 + $0x10] sm:$0xff]
        %v737 = vld [vmem:[#allocation12 + $0x18] sm:$0xff]
        %v738 = vld [vmem:[#allocation12 + $0x20] sm:$0xff]
        %v739 = vld [vmem:[#allocation12 + $0x28] sm:$0xff]
        %v740 = vld [vmem:[#allocation12 + $0x30] sm:$0xff]
        %v741 = vld [vmem:[#allocation12 + $0x38] sm:$0xff]
        %v742 = vld [vmem:[#allocation12 + $0x40] sm:$0xff]
        %v743 = vld [vmem:[#allocation12 + $0x48] sm:$0xff]
        %v744 = vld [vmem:[#allocation12 + $0x50] sm:$0xff]
        %v745 = vld [vmem:[#allocation12 + $0x58] sm:$0xff]
        %v746 = vld [vmem:[#allocation12 + $0x60] sm:$0xff]
        %v747 = vld [vmem:[#allocation12 + $0x68] sm:$0xff]
        %v748 = vld [vmem:[#allocation12 + $0x70] sm:$0xff]
        %v749 = vld [vmem:[#allocation12 + $0x78] sm:$0xff]
        %v750 = vpack.c.bf16 %v735, %v734
        %v751 = vpack.c.bf16 %v737, %v736
        %v752 = vpack.c.bf16 %v739, %v738
        %v753 = vpack.c.bf16 %v741, %v740
        %v754 = vpack.c.bf16 %v743, %v742
        %v755 = vpack.c.bf16 %v745, %v744
        %v756 = vpack.c.bf16 %v747, %v746
        %v757 = vpack.c.bf16 %v749, %v748
        %758 = vmatpush.bf16.msra.mxu0 %v757
        %759 = vmatpush.bf16.msra.mxu0 %v756
        %760 = vmatpush.bf16.msra.mxu0 %v755
        %761 = vmatpush.bf16.msra.mxu0 %v754
        %762 = vmatpush.bf16.msra.mxu0 %v753
        %763 = vmatpush.bf16.msra.mxu0 %v752
        %764 = vmatpush.bf16.msra.mxu0 %v751
        %765 = vmatpush.bf16.msra.mxu0 %v750
        %766 = vmatmul.bf16.gmra.mxu0 %v733
        %v767 = vpop.f32.mrf.mxu0
        %v768 = vadd.f32 0.0, %v767
        %v769 = vpop.f32.mrf.mxu0
        %770 = vdwg.mxu0
        %v771 = vadd.f32 %v730, %v768
        %772 = vst [vmem:[%s534] sm:$0xff] %v771
        %v773 = vmul.f32 %v771, %v771
        %774 = vadd.xlane.f32.xlu0 %v773
        %v775 = vpop.xlane.xlu0 %774
        %v776 = vmax.f32 %v775, 1e-24
        %v777 = vrsqrt.pop %v776
        %v778 = vmul.f32 %v777, %v776
        %v779 = vmul.f32 %v778, %v777
        %v780 = vmul.f32 0.5, %v779
        %v781 = vsub.f32 1.5, %v780
        %v782 = vmul.f32 %v777, %v781
        %vm783 = vweird.f32 %v776
        %vm784 = vweird.f32 %v777
        %vm785 = vmor %vm783, %vm784
        %v786 = vsel %vm785, %v777, %v782
        %v787 = vmul.f32 %v771, %v786
        %s788 = sld [smem:[#allocation2]]
        %v789 = vpack.c.bf16 %v787, %v787
        %v790 = vld [vmem:[#allocation14] sm:$0xff]
        %v791 = vld [vmem:[#allocation14 + $0x8] sm:$0xff]
        %v792 = vld [vmem:[#allocation14 + $0x10] sm:$0xff]
        %v793 = vld [vmem:[#allocation14 + $0x18] sm:$0xff]
        %v794 = vld [vmem:[#allocation14 + $0x20] sm:$0xff]
        %v795 = vld [vmem:[#allocation14 + $0x28] sm:$0xff]
        %v796 = vld [vmem:[#allocation14 + $0x30] sm:$0xff]
        %v797 = vld [vmem:[#allocation14 + $0x38] sm:$0xff]
        %v798 = vld [vmem:[#allocation14 + $0x40] sm:$0xff]
        %v799 = vld [vmem:[#allocation14 + $0x48] sm:$0xff]
        %v800 = vld [vmem:[#allocation14 + $0x50] sm:$0xff]
        %v801 = vld [vmem:[#allocation14 + $0x58] sm:$0xff]
        %v802 = vld [vmem:[#allocation14 + $0x60] sm:$0xff]
        %v803 = vld [vmem:[#allocation14 + $0x68] sm:$0xff]
        %v804 = vld [vmem:[#allocation14 + $0x70] sm:$0xff]
        %v805 = vld [vmem:[#allocation14 + $0x78] sm:$0xff]
        %v806 = vpack.c.bf16 %v791, %v790
        %v807 = vpack.c.bf16 %v793, %v792
        %v808 = vpack.c.bf16 %v795, %v794
        %v809 = vpack.c.bf16 %v797, %v796
        %v810 = vpack.c.bf16 %v799, %v798
        %v811 = vpack.c.bf16 %v801, %v800
        %v812 = vpack.c.bf16 %v803, %v802
        %v813 = vpack.c.bf16 %v805, %v804
        %814 = vmatpush.bf16.msra.mxu0 %v813
        %815 = vmatpush.bf16.msra.mxu0 %v812
        %816 = vmatpush.bf16.msra.mxu0 %v811
        %817 = vmatpush.bf16.msra.mxu0 %v810
        %818 = vmatpush.bf16.msra.mxu0 %v809
        %819 = vmatpush.bf16.msra.mxu0 %v808
        %820 = vmatpush.bf16.msra.mxu0 %v807
        %821 = vmatpush.bf16.msra.mxu0 %v806
        %822 = vmatmul.bf16.gmra.mxu0 %v789
        %v823 = vpop.f32.mrf.mxu0
        %v824 = vadd.f32 0.0, %v823
        %v825 = vpop.f32.mrf.mxu0
        %826 = vdwg.mxu0
        %v827 = vstv %s788
        %v828 = vmul.f32 %v827, %v824
        %829 = vst [vmem:[%s527] sm:$0xff] %v828
        %s830 = sand.u32 %s264, 1
        %s831 = scalar_lea.sflag [#allocation5], %s830
        %s832 = sand.u32 %s264, 1
        %s833 = smul.addr %s832, 8
        %s834 = scalar_lea.vmem [#allocation15], %s833
        %s835 = sand.u32 %s290, 1
        %s836 = scalar_lea.sflag [#allocation17], %s835
        %s837 = sand.u32 %s290, 1
        %s838 = smul.addr %s837, 8
        %s839 = scalar_lea.vmem [#allocation16], %s838
        // Predicated region
        $region89: #{tpu_custom_call.1} parent=59 // pred_check
          %p840 = pneg %p274
        $region90: #{tpu_custom_call.1} parent=59 // pred_check_branch
          %842 = sbr.rel (%p840) target = $region92
        $region91: #{tpu_custom_call.1} parent=59 // pred_region
          %844 = vsyncadd %s831, 0
          %s845 = smul.addr %s36, 8
          %s846 = scalar_lea.hbm %s10, %s845
          %s848 = sshll.u32 %s834, 4
          %s849 = int_to_ptr.vmem [resolvable:$true] %s848
          %s850 = sshll.u32 %s846, 4
          %s851 = int_to_ptr.hbm [resolvable:$true] %s850
          %853 = dma.vmem_to_hbm [thread:$0]  %s849, 128, %s851, %s831
        $region92: #{tpu_custom_call.1} parent=59 // pred_fallthru
          _
        // Predicated region
        $region93: #{tpu_custom_call.1} parent=59 // pred_check
          %p854 = pneg %p300
        $region94: #{tpu_custom_call.1} parent=59 // pred_check_branch
          %856 = sbr.rel (%p854) target = $region96
        $region95: #{tpu_custom_call.1} parent=59 // pred_region
          %858 = vsyncadd %s836, 0
          %s859 = smul.addr %s36, 8
          %s860 = scalar_lea.hbm %s11, %s859
          %s862 = sshll.u32 %s839, 4
          %s863 = int_to_ptr.vmem [resolvable:$true] %s862
          %s864 = sshll.u32 %s860, 4
          %s865 = int_to_ptr.hbm [resolvable:$true] %s864
          %867 = dma.vmem_to_hbm [thread:$0]  %s863, 128, %s865, %s836
        $region96: #{tpu_custom_call.1} parent=59 // pred_fallthru
          _
      $region60: #{tpu_custom_call.1} parent=5 // pred_fallthru
        _
      %p868 = scmp.le.s32.totalorder 2, %s31
      // Predicated region
      $region97: #{tpu_custom_call.1} parent=5 // pred_check
        %p869 = pneg %p868
      $region98: #{tpu_custom_call.1} parent=5 // pred_check_branch
        %871 = sbr.rel (%p869) target = $region100
      $region99: #{tpu_custom_call.1} parent=5 // pred_region
        %s872 = ssub.s32 %s31, 2
        // Predicated region
        $region101: #{tpu_custom_call.1} parent=99 // pred_check
          %p873 = pneg %p280
        $region102: #{tpu_custom_call.1} parent=99 // pred_check_branch
          %875 = sbr.rel (%p873) target = $region104
        $region103: #{tpu_custom_call.1} parent=99 // pred_region
          %s876 = sand.u32 %s265, 1
          %s877 = scalar_lea.sflag [#allocation5], %s876
          %s878 = sand.u32 %s265, 1
          %s879 = smul.addr %s878, 8
          %s880 = scalar_lea.vmem [#allocation15], %s879
          %882 = dma.done %s877, 128
        $region104: #{tpu_custom_call.1} parent=99 // pred_fallthru
          _
        // Predicated region
        $region105: #{tpu_custom_call.1} parent=99 // pred_check
          %p883 = pneg %p306
        $region106: #{tpu_custom_call.1} parent=99 // pred_check_branch
          %885 = sbr.rel (%p883) target = $region108
        $region107: #{tpu_custom_call.1} parent=99 // pred_region
          %s886 = sand.u32 %s291, 1
          %s887 = scalar_lea.sflag [#allocation17], %s886
          %s888 = sand.u32 %s291, 1
          %s889 = smul.addr %s888, 8
          %s890 = scalar_lea.vmem [#allocation16], %s889
          %892 = dma.done %s887, 128
        $region108: #{tpu_custom_call.1} parent=99 // pred_fallthru
          _
      $region100: #{tpu_custom_call.1} parent=5 // pred_fallthru
        _
    $region6: #{tpu_custom_call.1} parent=1 // loop_footer
      %s35 = sadd.s32 1, %s31
    $region7: #{tpu_custom_call.1} parent=1 // loop_footer_branch
      %30 = sbr.rel target = $region3
    $region8: #{tpu_custom_call.1} parent=1 // loop_exit
      _
    %893 = vsyncpa [#allocation4], 1
    %s894 = scalar_lea.sflag [#allocation4], 1
    %895 = vsyncpa %s894, 1
    %896 = vsyncpa [#allocation7], 1
    %s897 = scalar_lea.sflag [#allocation7], 1
    %898 = vsyncpa %s897, 1
    %899 = vsyncpa [#allocation10], 1
    %900 = vsyncpa [#allocation13], 1
    %901 = vsyncpa [#allocation5], 1
    %s902 = scalar_lea.sflag [#allocation5], 1
    %903 = vsyncpa %s902, 1
    %904 = vsyncpa [#allocation17], 1
    %s905 = scalar_lea.sflag [#allocation17], 1
    %906 = vsyncpa %s905, 1

</llo_original>
